<compile_context>
chip_gen: v7x
topology: tpu7x:2x2x1
jax: 0.10.0
libtpu: 0.0.40
codegen_flags: <defaults>
</compile_context>

<pallas_src>
import math
import functools

import jax
import jax.numpy as jnp
from jax.experimental import pallas as pl
from jax.experimental.pallas import tpu as pltpu

# ---------------------------------------------------------------------------
# Model hyper-parameters (match MLPSAC.__init__)
# ---------------------------------------------------------------------------
ACT_LIMIT = 10.0
LOG_STD_MIN = -10.0
LOG_STD_MAX = math.log(0.5)
EPS1 = 1.0 - 1e-4
ATANH_EPS1 = math.atanh(EPS1)      # clamp in pre-tanh space (== clamp(tanh)+atanh)
OUT_LANES = 128                    # lane-dense packed output width


def _rup(x, m):
    return (x + m - 1) // m * m


def _softplus(z):
    # numerically-stable softplus from VPU/EUP-friendly primitives
    return jnp.maximum(z, 0.0) + jnp.log1p(jnp.exp(-jnp.abs(z)))


# ---------------------------------------------------------------------------
# Kernel factory (dims are static and captured by closure)
# ---------------------------------------------------------------------------
def _slab_layout(ni, h, a):
    o1 = 0
    o2 = o1 + _rup(ni, 8)          # 8-aligned row offsets inside the weight slab
    o3 = o2 + _rup(h, 8)
    oh = o3 + _rup(h, 8)
    n_rows = oh + _rup(h, 8)
    hc = max(h, 2 * a)             # slab column count
    nb = 3 * h + 2 * a             # packed bias lane count
    return o1, o2, o3, oh, n_rows, hc, nb


def _make_kernel(ni, h, a):
    o1, o2, o3, oh, n_rows, hc, nb = _slab_layout(ni, h, a)

    def kernel(state_ref, noise_ref, w_ref, b_ref, out_ref):
        x = state_ref[...]
        noise = noise_ref[...]

        # --- actor_base: 3x (Linear + ReLU); weights sliced from the packed slab
        hdn = jnp.dot(x, w_ref[o1:o1 + ni, 0:h],
                      preferred_element_type=jnp.float32) + b_ref[:, 0:h]
        hdn = jnp.maximum(hdn, 0.0)
        hdn = jnp.dot(hdn, w_ref[o2:o2 + h, 0:h],
                      preferred_element_type=jnp.float32) + b_ref[:, h:2 * h]
        hdn = jnp.maximum(hdn, 0.0)
        hdn = jnp.dot(hdn, w_ref[o3:o3 + h, 0:h],
                      preferred_element_type=jnp.float32) + b_ref[:, 2 * h:3 * h]
        hdn = jnp.maximum(hdn, 0.0)

        # --- fused mean / log_std heads: one MXU matmul, split with static slices
        heads = (jnp.dot(hdn, w_ref[oh:oh + h, 0:2 * a],
                         preferred_element_type=jnp.float32)
                 + b_ref[:, 3 * h:3 * h + 2 * a])
        mean = heads[:, 0:a]
        # StraightThrougClamp forward == clamp
        log_std = jnp.clip(heads[:, a:2 * a], LOG_STD_MIN, LOG_STD_MAX)
        std = jnp.exp(log_std)

        # --- reparameterized sample: action_t = noise * std + mean
        action_t = noise * std + mean

        # --- Normal(0,1).log_prob((action_t-mean)/std).sum(-1) - log_std.sum(-1)
        #     (action_t - mean)/std == noise exactly
        lp = (jnp.sum(-0.5 * noise * noise, axis=-1, keepdims=True)
              - 0.5 * math.log(2.0 * math.pi) * a
              - jnp.sum(log_std, axis=-1, keepdims=True))

        # --- to_box(action_t, act_limit): clamp in pre-tanh space (no atanh)
        u = jnp.clip(action_t, -ATANH_EPS1, ATANH_EPS1)
        act = ACT_LIMIT * jnp.tanh(u)
        ld = (-jnp.sum(2.0 * (math.log(2.0) - u - _softplus(-2.0 * u)),
                       axis=-1, keepdims=True)
              - math.log(ACT_LIMIT) * a)
        lp = lp + ld

        # --- pack lane-dense output: lanes [0,A) = action, lane A = log_prob
        out_ref[...] = jnp.zeros(out_ref.shape, out_ref.dtype)
        out_ref[:, 0:a] = act
        out_ref[:, a:a + 1] = lp

    return kernel, n_rows, hc, nb


# ---------------------------------------------------------------------------
# Host-side param packing (one weight slab + one bias row)
# ---------------------------------------------------------------------------
def pack_params(params, ni, h, a):
    o1, o2, o3, oh, n_rows, hc, nb = _slab_layout(ni, h, a)
    w = jnp.zeros((n_rows, hc), jnp.float32)
    w = w.at[o1:o1 + ni, 0:h].set(params["w1"])
    w = w.at[o2:o2 + h, 0:h].set(params["w2"])
    w = w.at[o3:o3 + h, 0:h].set(params["w3"])
    w = w.at[oh:oh + h, 0:a].set(params["wm"])
    w = w.at[oh:oh + h, a:2 * a].set(params["ws"])

    b = jnp.zeros((1, nb), jnp.float32)
    b = b.at[:, 0:h].set(params["b1"])
    b = b.at[:, h:2 * h].set(params["b2"])
    b = b.at[:, 2 * h:3 * h].set(params["b3"])
    b = b.at[:, 3 * h:3 * h + a].set(params["bm"])
    b = b.at[:, 3 * h + a:3 * h + 2 * a].set(params["bs"])
    return w, b


# ---------------------------------------------------------------------------
# Forward wrapper: 1-D batch grid, weights VMEM-resident, lane-dense output
# ---------------------------------------------------------------------------
def make_mlpsac_forward(ni, h, a, tb=512):
    kernel, n_rows, hc, nb = _make_kernel(ni, h, a)

    @jax.jit
    def forward(state, noise, w_slab, b_slab):
        B = state.shape[0]
        TB = min(tb, _rup(B, 8))                 # batch tile (multiple of 8)
        Bp = _rup(B, TB)
        if Bp != B:
            state = jnp.pad(state, ((0, Bp - B), (0, 0)))
            noise = jnp.pad(noise, ((0, Bp - B), (0, 0)))

        packed = pl.pallas_call(
            kernel,
            out_shape=jax.ShapeDtypeStruct((Bp, OUT_LANES), jnp.float32),
            grid_spec=pltpu.PrefetchScalarGridSpec(
                num_scalar_prefetch=0,
                grid=(Bp // TB,),
                in_specs=[
                    pl.BlockSpec((TB, ni), lambda i: (i, 0)),      # state (pipelined)
                    pl.BlockSpec((TB, a), lambda i: (i, 0)),       # noise (pipelined)
                    pl.BlockSpec((n_rows, hc), lambda i: (0, 0)),  # weight slab (resident)
                    pl.BlockSpec((1, nb), lambda i: (0, 0)),       # bias row (resident)
                ],
                out_specs=pl.BlockSpec((TB, OUT_LANES), lambda i: (i, 0)),
            ),
            compiler_params=pltpu.CompilerParams(
                dimension_semantics=("parallel",),       # shards across v7x's 2 TCs
                vmem_limit_bytes=32 * 1024 * 1024,       # explicit budget (v7x-safe)
            ),
        )(state, noise, w_slab, b_slab)

        action = packed[:B, 0:a]
        log_prob = packed[:B, a:a + 1]
        entropy = -log_prob
        # get_value(state) is identically zero -> emitted host-side, no kernel store
        value = jnp.zeros((B, 1), jnp.float32)
        return action, log_prob, entropy, value

    return forward


# ---------------------------------------------------------------------------
# Deterministic parameter init (shapes from MLPSAC.__init__)
# ---------------------------------------------------------------------------
def init_params(key, num_inputs, num_outputs, hidden_size):
    ks = jax.random.split(key, 10)

    def torch_linear(kw, kb, fan_in, fan_out):
        bound = 1.0 / math.sqrt(fan_in)
        w = jax.random.uniform(kw, (fan_in, fan_out), jnp.float32, -bound, bound)
        b = jax.random.uniform(kb, (1, fan_out), jnp.float32, -bound, bound)
        return w, b

    w1, b1 = torch_linear(ks[0], ks[1], num_inputs, hidden_size)
    w2, b2 = torch_linear(ks[2], ks[3], hidden_size, hidden_size)
    w3, b3 = torch_linear(ks[4], ks[5], hidden_size, hidden_size)
    init_w = 0.003
    wm = jax.random.uniform(ks[6], (hidden_size, num_outputs), jnp.float32, -init_w, init_w)
    bm = jnp.zeros((1, num_outputs), jnp.float32)
    ws = jax.random.uniform(ks[7], (hidden_size, num_outputs), jnp.float32, -init_w, init_w)
    bs = jnp.zeros((1, num_outputs), jnp.float32)
    return dict(w1=w1, b1=b1, w2=w2, b2=b2, w3=w3, b3=b3,
                wm=wm, bm=bm, ws=ws, bs=bs)


# ---------------------------------------------------------------------------
# Pure-JAX reference replicating the PyTorch forward() exactly
# ---------------------------------------------------------------------------
def reference_forward(state, noise, p):
    h = jnp.maximum(state @ p["w1"] + p["b1"], 0.0)
    h = jnp.maximum(h @ p["w2"] + p["b2"], 0.0)
    h = jnp.maximum(h @ p["w3"] + p["b3"], 0.0)
    mean = h @ p["wm"] + p["bm"]
    log_std = jnp.clip(h @ p["ws"] + p["bs"], LOG_STD_MIN, LOG_STD_MAX)
    std = jnp.exp(log_std)
    action_t = noise * std + mean
    A = noise.shape[-1]
    lp = jnp.sum(-0.5 * noise ** 2 - 0.5 * math.log(2 * math.pi), -1) - jnp.sum(log_std, -1)
    a = jnp.clip(jnp.tanh(action_t), -EPS1, EPS1)
    a_t = jnp.arctanh(a)
    sp = jnp.maximum(-2 * a_t, 0.0) + jnp.log1p(jnp.exp(-jnp.abs(-2 * a_t)))
    ld = -jnp.sum(2 * (math.log(2.0) - a_t - sp), -1) - math.log(ACT_LIMIT) * A
    lp = (lp + ld)[:, None]
    return ACT_LIMIT * a, lp, -lp, jnp.zeros((state.shape[0], 1), jnp.float32)


# TODO(synk): soft_q_net / target_q_net (QNetwork) and the discrete Categorical
# branch are not exercised by MLPSAC.forward(), so they are not implemented here.

if __name__ == "__main__":
    B, NUM_INPUTS, NUM_OUTPUTS, HIDDEN = 16, 16, 4, 32

    key = jax.random.PRNGKey(0)
    kp, ks, kn = jax.random.split(key, 3)
    params = init_params(kp, NUM_INPUTS, NUM_OUTPUTS, HIDDEN)
    state = jax.random.normal(ks, (B, NUM_INPUTS), jnp.float32)
    noise = jax.random.normal(kn, (B, NUM_OUTPUTS), jnp.float32)  # torch.randn equivalent

    w_slab, b_slab = pack_params(params, NUM_INPUTS, HIDDEN, NUM_OUTPUTS)
    # tb=8 so the toy batch of 16 exercises the 2-step batch grid / pipelining
    forward = make_mlpsac_forward(NUM_INPUTS, HIDDEN, NUM_OUTPUTS, tb=8)

    action, log_prob, entropy, value = forward(state, noise, w_slab, b_slab)
    jax.block_until_ready((action, log_prob, entropy, value))

    ra, rlp, rent, rv = reference_forward(state, noise, params)
    assert jnp.allclose(action, ra, atol=1e-4, rtol=1e-4)
    assert jnp.allclose(log_prob, rlp, atol=1e-3, rtol=1e-3)
    assert jnp.allclose(entropy, rent, atol=1e-3, rtol=1e-3)
    assert jnp.allclose(value, rv)

    print("KERNEL_OK")
</pallas_src>

<mosaic_0001>
module attributes {stable_mosaic.version = 11 : i64} {
  func.func @kernel(%arg0: i32, %arg1: memref<8x16xf32, #tpu.memory_space<vmem>>, %arg2: memref<8x4xf32, #tpu.memory_space<vmem>>, %arg3: memref<112x32xf32, #tpu.memory_space<vmem>>, %arg4: memref<1x104xf32, #tpu.memory_space<vmem>>, %arg5: memref<8x128xf32, #tpu.memory_space<vmem>>) attributes {dimension_semantics = [#tpu.dimension_semantics<parallel>], iteration_bounds = array<i64: 2>, scalar_prefetch = 0 : i64, scratch_operands = 0 : i64, tpu.core_type = #tpu.core_type<tc>, window_params = [{transform_indices = @transform_0, window_bounds = array<i64: 8, 16>}, {transform_indices = @transform_1, window_bounds = array<i64: 8, 4>}, {pipeline_mode = #tpu.pipeline_mode<synchronous>, transform_indices = @transform_2, window_bounds = array<i64: 112, 32>}, {pipeline_mode = #tpu.pipeline_mode<synchronous>, transform_indices = @transform_3, window_bounds = array<i64: 1, 104>}, {transform_indices = @transform_4, window_bounds = array<i64: 8, 128>}]} {
    %c0 = arith.constant 0 : index
    %c0_0 = arith.constant 0 : index
    %0 = vector.load %arg1[%c0, %c0_0] : memref<8x16xf32, #tpu.memory_space<vmem>>, vector<8x16xf32>
    %c0_1 = arith.constant 0 : index
    %c0_2 = arith.constant 0 : index
    %1 = vector.load %arg2[%c0_1, %c0_2] : memref<8x4xf32, #tpu.memory_space<vmem>>, vector<8x4xf32>
    %c0_3 = arith.constant 0 : index
    %c0_4 = arith.constant 0 : index
    %2 = vector.load %arg3[%c0_3, %c0_4] : memref<112x32xf32, #tpu.memory_space<vmem>>, vector<16x32xf32>
    %cst = arith.constant dense<0.000000e+00> : vector<8x32xf32>
    %3 = tpu.matmul %0, %2, %cst {dimension_numbers = #tpu.dot_dimension_numbers<[1], [0], [0], [1], [0, 0, 1, 1], [], []>} : vector<8x16xf32>, vector<16x32xf32>, vector<8x32xf32> -> vector<8x32xf32>
    %c0_5 = arith.constant 0 : index
    %c0_6 = arith.constant 0 : index
    %4 = vector.load %arg4[%c0_5, %c0_6] : memref<1x104xf32, #tpu.memory_space<vmem>>, vector<1x32xf32>
    %5 = vector.broadcast %4 : vector<1x32xf32> to vector<8x32xf32>
    %6 = arith.addf %3, %5 : vector<8x32xf32>
    %cst_7 = arith.constant 0.000000e+00 : f32
    %7 = vector.broadcast %cst_7 : f32 to vector<8x32xf32>
    %8 = arith.maximumf %6, %7 : vector<8x32xf32>
    %c16 = arith.constant 16 : index
    %c0_8 = arith.constant 0 : index
    %9 = vector.load %arg3[%c16, %c0_8] : memref<112x32xf32, #tpu.memory_space<vmem>>, vector<32x32xf32>
    %cst_9 = arith.constant dense<0.000000e+00> : vector<8x32xf32>
    %10 = tpu.matmul %8, %9, %cst_9 {dimension_numbers = #tpu.dot_dimension_numbers<[1], [0], [0], [1], [0, 0, 1, 1], [], []>} : vector<8x32xf32>, vector<32x32xf32>, vector<8x32xf32> -> vector<8x32xf32>
    %c0_10 = arith.constant 0 : index
    %c32 = arith.constant 32 : index
    %11 = vector.load %arg4[%c0_10, %c32] : memref<1x104xf32, #tpu.memory_space<vmem>>, vector<1x32xf32>
    %12 = vector.broadcast %11 : vector<1x32xf32> to vector<8x32xf32>
    %13 = arith.addf %10, %12 : vector<8x32xf32>
    %cst_11 = arith.constant 0.000000e+00 : f32
    %14 = vector.broadcast %cst_11 : f32 to vector<8x32xf32>
    %15 = arith.maximumf %13, %14 : vector<8x32xf32>
    %c48 = arith.constant 48 : index
    %c0_12 = arith.constant 0 : index
    %16 = vector.load %arg3[%c48, %c0_12] : memref<112x32xf32, #tpu.memory_space<vmem>>, vector<32x32xf32>
    %cst_13 = arith.constant dense<0.000000e+00> : vector<8x32xf32>
    %17 = tpu.matmul %15, %16, %cst_13 {dimension_numbers = #tpu.dot_dimension_numbers<[1], [0], [0], [1], [0, 0, 1, 1], [], []>} : vector<8x32xf32>, vector<32x32xf32>, vector<8x32xf32> -> vector<8x32xf32>
    %c0_14 = arith.constant 0 : index
    %c64 = arith.constant 64 : index
    %18 = vector.load %arg4[%c0_14, %c64] : memref<1x104xf32, #tpu.memory_space<vmem>>, vector<1x32xf32>
    %19 = vector.broadcast %18 : vector<1x32xf32> to vector<8x32xf32>
    %20 = arith.addf %17, %19 : vector<8x32xf32>
    %cst_15 = arith.constant 0.000000e+00 : f32
    %21 = vector.broadcast %cst_15 : f32 to vector<8x32xf32>
    %22 = arith.maximumf %20, %21 : vector<8x32xf32>
    %c80 = arith.constant 80 : index
    %c0_16 = arith.constant 0 : index
    %23 = vector.load %arg3[%c80, %c0_16] : memref<112x32xf32, #tpu.memory_space<vmem>>, vector<32x8xf32>
    %cst_17 = arith.constant dense<0.000000e+00> : vector<8x8xf32>
    %24 = tpu.matmul %22, %23, %cst_17 {dimension_numbers = #tpu.dot_dimension_numbers<[1], [0], [0], [1], [0, 0, 1, 1], [], []>} : vector<8x32xf32>, vector<32x8xf32>, vector<8x8xf32> -> vector<8x8xf32>
    %c0_18 = arith.constant 0 : index
    %c96 = arith.constant 96 : index
    %25 = vector.load %arg4[%c0_18, %c96] : memref<1x104xf32, #tpu.memory_space<vmem>>, vector<1x8xf32>
    %26 = vector.broadcast %25 : vector<1x8xf32> to vector<8x8xf32>
    %27 = arith.addf %24, %26 : vector<8x8xf32>
    %28 = vector.extract_strided_slice %27 {offsets = [0, 0], sizes = [8, 4], strides = [1, 1]} : vector<8x8xf32> to vector<8x4xf32>
    %29 = vector.extract_strided_slice %27 {offsets = [0, 4], sizes = [8, 4], strides = [1, 1]} : vector<8x8xf32> to vector<8x4xf32>
    %cst_19 = arith.constant -1.000000e+01 : f32
    %cst_20 = arith.constant -0.693147182 : f32
    %30 = vector.broadcast %cst_19 : f32 to vector<8x4xf32>
    %31 = arith.maximumf %30, %29 : vector<8x4xf32>
    %32 = vector.broadcast %cst_20 : f32 to vector<8x4xf32>
    %33 = arith.minimumf %32, %31 : vector<8x4xf32>
    %34 = math.exp %33 : vector<8x4xf32>
    %35 = arith.mulf %1, %34 : vector<8x4xf32>
    %36 = arith.addf %35, %28 : vector<8x4xf32>
    %cst_21 = arith.constant -5.000000e-01 : f32
    %37 = vector.broadcast %cst_21 : f32 to vector<8x4xf32>
    %38 = arith.mulf %37, %1 : vector<8x4xf32>
    %39 = arith.mulf %38, %1 : vector<8x4xf32>
    %cst_22 = arith.constant dense<0.000000e+00> : vector<8xf32>
    %40 = vector.multi_reduction <add>, %39, %cst_22 [1] : vector<8x4xf32> to vector<8xf32>
    %41 = vector.shape_cast %40 : vector<8xf32> to vector<8x1xf32>
    %cst_23 = arith.constant 3.67575407 : f32
    %42 = vector.broadcast %cst_23 : f32 to vector<8x1xf32>
    %43 = arith.subf %41, %42 : vector<8x1xf32>
    %cst_24 = arith.constant dense<0.000000e+00> : vector<8xf32>
    %44 = vector.multi_reduction <add>, %33, %cst_24 [1] : vector<8x4xf32> to vector<8xf32>
    %45 = vector.shape_cast %44 : vector<8xf32> to vector<8x1xf32>
    %46 = arith.subf %43, %45 : vector<8x1xf32>
    %cst_25 = arith.constant -4.95171881 : f32
    %cst_26 = arith.constant 4.95171881 : f32
    %47 = vector.broadcast %cst_25 : f32 to vector<8x4xf32>
    %48 = arith.maximumf %47, %36 : vector<8x4xf32>
    %49 = vector.broadcast %cst_26 : f32 to vector<8x4xf32>
    %50 = arith.minimumf %49, %48 : vector<8x4xf32>
    %51 = math.tanh %50 : vector<8x4xf32>
    %cst_27 = arith.constant 1.000000e+01 : f32
    %52 = vector.broadcast %cst_27 : f32 to vector<8x4xf32>
    %53 = arith.mulf %52, %51 : vector<8x4xf32>
    %cst_28 = arith.constant 0.693147182 : f32
    %54 = vector.broadcast %cst_28 : f32 to vector<8x4xf32>
    %55 = arith.subf %54, %50 : vector<8x4xf32>
    %cst_29 = arith.constant -2.000000e+00 : f32
    %56 = vector.broadcast %cst_29 : f32 to vector<8x4xf32>
    %57 = arith.mulf %56, %50 : vector<8x4xf32>
    %cst_30 = arith.constant 0.000000e+00 : f32
    %58 = vector.broadcast %cst_30 : f32 to vector<8x4xf32>
    %59 = arith.maximumf %57, %58 : vector<8x4xf32>
    %60 = math.absf %57 : vector<8x4xf32>
    %cst_31 = arith.constant 0.000000e+00 : f32
    %61 = vector.broadcast %cst_31 : f32 to vector<8x4xf32>
    %62 = arith.subf %61, %60 : vector<8x4xf32>
    %63 = math.exp %62 : vector<8x4xf32>
    %64 = math.log1p %63 : vector<8x4xf32>
    %65 = arith.addf %59, %64 : vector<8x4xf32>
    %66 = arith.subf %55, %65 : vector<8x4xf32>
    %cst_32 = arith.constant 2.000000e+00 : f32
    %67 = vector.broadcast %cst_32 : f32 to vector<8x4xf32>
    %68 = arith.mulf %67, %66 : vector<8x4xf32>
    %cst_33 = arith.constant dense<0.000000e+00> : vector<8xf32>
    %69 = vector.multi_reduction <add>, %68, %cst_33 [1] : vector<8x4xf32> to vector<8xf32>
    %70 = vector.shape_cast %69 : vector<8xf32> to vector<8x1xf32>
    %cst_34 = arith.constant 0.000000e+00 : f32
    %71 = vector.broadcast %cst_34 : f32 to vector<8x1xf32>
    %72 = arith.subf %71, %70 : vector<8x1xf32>
    %cst_35 = arith.constant 9.21034049 : f32
    %73 = vector.broadcast %cst_35 : f32 to vector<8x1xf32>
    %74 = arith.subf %72, %73 : vector<8x1xf32>
    %75 = arith.addf %46, %74 : vector<8x1xf32>
    %cst_36 = arith.constant 0.000000e+00 : f32
    %76 = vector.broadcast %cst_36 : f32 to vector<8x128xf32>
    %c0_37 = arith.constant 0 : index
    %c0_38 = arith.constant 0 : index
    %77 = vector.load %arg5[%c0_37, %c0_38] : memref<8x128xf32, #tpu.memory_space<vmem>>, vector<8x128xf32>
    tpu.vector_store %arg5[%c0_37, %c0_38], %76 {strides = array<i32>} : memref<8x128xf32, #tpu.memory_space<vmem>>, vector<8x128xf32>,
    %c0_39 = arith.constant 0 : index
    %c0_40 = arith.constant 0 : index
    %78 = vector.load %arg5[%c0_39, %c0_40] : memref<8x128xf32, #tpu.memory_space<vmem>>, vector<8x4xf32>
    tpu.vector_store %arg5[%c0_39, %c0_40], %53 {strides = array<i32>} : memref<8x128xf32, #tpu.memory_space<vmem>>, vector<8x4xf32>,
    %c0_41 = arith.constant 0 : index
    %c4 = arith.constant 4 : index
    %79 = vector.load %arg5[%c0_41, %c4] : memref<8x128xf32, #tpu.memory_space<vmem>>, vector<8x1xf32>
    tpu.vector_store %arg5[%c0_41, %c4], %75 {strides = array<i32>} : memref<8x128xf32, #tpu.memory_space<vmem>>, vector<8x1xf32>,
    return
  }
  func.func @transform_0(%arg0: i32) -> (i32, i32) {
    %c0_i32 = arith.constant 0 : i32
    %c0_i32_0 = arith.constant 0 : i32
    return %arg0, %c0_i32 : i32, i32
  }
  func.func @transform_1(%arg0: i32) -> (i32, i32) {
    %c0_i32 = arith.constant 0 : i32
    %c0_i32_0 = arith.constant 0 : i32
    return %arg0, %c0_i32 : i32, i32
  }
  func.func @transform_2(%arg0: i32) -> (i32, i32) {
    %c0_i32 = arith.constant 0 : i32
    %c0_i32_0 = arith.constant 0 : i32
    %c0_i32_1 = arith.constant 0 : i32
    return %c0_i32, %c0_i32_0 : i32, i32
  }
  func.func @transform_3(%arg0: i32) -> (i32, i32) {
    %c0_i32 = arith.constant 0 : i32
    %c0_i32_0 = arith.constant 0 : i32
    %c0_i32_1 = arith.constant 0 : i32
    return %c0_i32, %c0_i32_0 : i32, i32
  }
  func.func @transform_4(%arg0: i32) -> (i32, i32) {
    %c0_i32 = arith.constant 0 : i32
    %c0_i32_0 = arith.constant 0 : i32
    return %arg0, %c0_i32 : i32, i32
  }
}

</mosaic_0001>

<llo_original>
// kernel: forward.1
$region0: #{forward.1}
  #allocation0 [shape = 'u32[]', space=smem, size = 0x4, offset = 0x4, fixed_abs, tag = 'smem constant byte address 0x4 - core index']
  #allocation1 [shape = 'u32[144,128]{1,0:T(1,128)}', space=vmem, size = 0x12000, scoped, tag = 'internal scratch']
  %s0 = inlined_call_operand.vmem [shape: f32[16,16], index: 0, kind: input, shape index: {}]
  %s1 = inlined_call_operand.vmem [shape: f32[16,4], index: 1, kind: input, shape index: {}]
  %s2 = inlined_call_operand.vmem [shape: f32[112,32], index: 2, kind: input, shape index: {}]
  %s3 = inlined_call_operand.vmem [shape: f32[1,104], index: 3, kind: input, shape index: {}]
  %s4 = inlined_call_operand.vmem [shape: f32[16,128], index: 4, kind: output, shape index: {}]
  %s5 = sld [smem:[#allocation0]]
  $region49: #{forward.1} parent=0
    _
  %s7 = ssub.s32 1, %s5
  %s8 = scalar_select 0, %s7, %s5
  loop: start=0, step=1, limit=4
  $region2: #{forward.1} parent=0 // loop_pre_header
    _
  $region3: #{forward.1} parent=0 // loop_header
    %s10 = sphi 0, %s14
    %p11 = scmp.ge.s32.totalorder %s10, 4
    %s20 = sphi 0, %s22
    %s23 = sphi 0, %s20
    %s24 = sphi 0, %s23
    %s40 = sphi 0, %s24
    %s46 = sphi 0, %s48
    %s49 = sphi 0, %s46
    %s50 = sphi 0, %s49
    %s66 = sphi 0, %s50
    %s70 = sphi 0, %s70
    %s72 = sphi 0, %s70
    %s73 = sphi 0, %s72
    %s87 = sphi 0, %s73
    %s91 = sphi 0, %s91
    %s93 = sphi 0, %s91
    %s94 = sphi 0, %s93
    %s108 = sphi 0, %s94
    %s114 = sphi 0, %s116
    %s117 = sphi 0, %s114
    %s118 = sphi 0, %s117
    %s134 = sphi 0, %s118
  $region4: #{forward.1} parent=0 // loop_header_branch
    %13 = sbr.rel (%p11) target = $region8
  $region5: #{forward.1} parent=0 // loop_body
    %s15 = ssub.s32 %s10, 1
    %s16 = ssub.s32 %s10, 2
    %s17 = sadd.s32 %s10, 1
    %s18 = ssub.s32 %s10, %s17
    %p19 = scmp.eq.s32.totalorder %s18, 0
    %s21 = sadd.s32 %s20, 1
    %s22 = scalar_select %p19, %s20, %s21
    %p25 = pneg %p19
    %p26 = scmp.eq.s32.totalorder %s10, 1
    %p27 = por %p25, %p26
    %p28 = scmp.ne.s32.totalorder %s20, %s23
    %p29 = scmp.eq.s32.totalorder %s10, 0
    %p30 = por %p28, %p29
    %p31 = scmp.ne.s32.totalorder %s20, %s23
    %p32 = scmp.eq.s32.totalorder %s15, 1
    %p33 = por %p31, %p32
    %p34 = scmp.ne.s32.totalorder %s23, %s24
    %p35 = scmp.eq.s32.totalorder %s15, 0
    %p36 = por %p34, %p35
    %p37 = scmp.ne.s32.totalorder %s23, %s24
    %p38 = scmp.eq.s32.totalorder %s16, 1
    %p39 = por %p37, %p38
    %p41 = scmp.ne.s32.totalorder %s24, %s40
    %p42 = scmp.eq.s32.totalorder %s16, 0
    %p43 = por %p41, %p42
    %s44 = ssub.s32 %s10, %s17
    %p45 = scmp.eq.s32.totalorder %s44, 0
    %s47 = sadd.s32 %s46, 1
    %s48 = scalar_select %p45, %s46, %s47
    %p51 = pneg %p45
    %p52 = scmp.eq.s32.totalorder %s10, 1
    %p53 = por %p51, %p52
    %p54 = scmp.ne.s32.totalorder %s46, %s49
    %p55 = scmp.eq.s32.totalorder %s10, 0
    %p56 = por %p54, %p55
    %p57 = scmp.ne.s32.totalorder %s46, %s49
    %p58 = scmp.eq.s32.totalorder %s15, 1
    %p59 = por %p57, %p58
    %p60 = scmp.ne.s32.totalorder %s49, %s50
    %p61 = scmp.eq.s32.totalorder %s15, 0
    %p62 = por %p60, %p61
    %p63 = scmp.ne.s32.totalorder %s49, %s50
    %p64 = scmp.eq.s32.totalorder %s16, 1
    %p65 = por %p63, %p64
    %p67 = scmp.ne.s32.totalorder %s50, %s66
    %p68 = scmp.eq.s32.totalorder %s16, 0
    %p69 = por %p67, %p68
    %s71 = sadd.s32 %s70, 1
    %p74 = scmp.eq.s32.totalorder %s10, 1
    %p75 = scmp.ne.s32.totalorder %s70, %s72
    %p76 = scmp.eq.s32.totalorder %s10, 0
    %p77 = por %p75, %p76
    %p78 = scmp.ne.s32.totalorder %s70, %s72
    %p79 = scmp.eq.s32.totalorder %s15, 1
    %p80 = por %p78, %p79
    %p81 = scmp.ne.s32.totalorder %s72, %s73
    %p82 = scmp.eq.s32.totalorder %s15, 0
    %p83 = por %p81, %p82
    %p84 = scmp.ne.s32.totalorder %s72, %s73
    %p85 = scmp.eq.s32.totalorder %s16, 1
    %p86 = por %p84, %p85
    %p88 = scmp.ne.s32.totalorder %s73, %s87
    %p89 = scmp.eq.s32.totalorder %s16, 0
    %p90 = por %p88, %p89
    %s92 = sadd.s32 %s91, 1
    %p95 = scmp.eq.s32.totalorder %s10, 1
    %p96 = scmp.ne.s32.totalorder %s91, %s93
    %p97 = scmp.eq.s32.totalorder %s10, 0
    %p98 = por %p96, %p97
    %p99 = scmp.ne.s32.totalorder %s91, %s93
    %p100 = scmp.eq.s32.totalorder %s15, 1
    %p101 = por %p99, %p100
    %p102 = scmp.ne.s32.totalorder %s93, %s94
    %p103 = scmp.eq.s32.totalorder %s15, 0
    %p104 = por %p102, %p103
    %p105 = scmp.ne.s32.totalorder %s93, %s94
    %p106 = scmp.eq.s32.totalorder %s16, 1
    %p107 = por %p105, %p106
    %p109 = scmp.ne.s32.totalorder %s94, %s108
    %p110 = scmp.eq.s32.totalorder %s16, 0
    %p111 = por %p109, %p110
    %s112 = ssub.s32 %s10, %s17
    %p113 = scmp.eq.s32.totalorder %s112, 0
    %s115 = sadd.s32 %s114, 1
    %s116 = scalar_select %p113, %s114, %s115
    %p119 = pneg %p113
    %p120 = scmp.eq.s32.totalorder %s10, 1
    %p121 = por %p119, %p120
    %p122 = scmp.ne.s32.totalorder %s114, %s117
    %p123 = scmp.eq.s32.totalorder %s10, 0
    %p124 = por %p122, %p123
    %p125 = scmp.ne.s32.totalorder %s114, %s117
    %p126 = scmp.eq.s32.totalorder %s15, 1
    %p127 = por %p125, %p126
    %p128 = scmp.ne.s32.totalorder %s117, %s118
    %p129 = scmp.eq.s32.totalorder %s15, 0
    %p130 = por %p128, %p129
    %p131 = scmp.ne.s32.totalorder %s117, %s118
    %p132 = scmp.eq.s32.totalorder %s16, 1
    %p133 = por %p131, %p132
    %p135 = scmp.ne.s32.totalorder %s118, %s134
    %p136 = scmp.eq.s32.totalorder %s16, 0
    %p137 = por %p135, %p136
    %p138 = scmp.le.s32.totalorder 1, %s10
    %p139 = scmp.lt.s32.totalorder %s10, 3
    %p140 = pnand %p138, %p139
    %p141 = pneg %p140
    // Predicated region
    $region9: #{forward.1} parent=5 // pred_check
      _
    $region10: #{forward.1} parent=5 // pred_check_branch
      %143 = sbr.rel (%p140) target = $region12
    $region11: #{forward.1} parent=5 // pred_region
      %s144 = ssub.s32 %s10, 1
      // Predicated region
      $region13: #{forward.1} parent=11 // pred_check
        %p145 = pneg %p83
      $region14: #{forward.1} parent=11 // pred_check_branch
        %147 = sbr.rel (%p145) target = $region16
      $region15: #{forward.1} parent=11 // pred_region
        _
      $region16: #{forward.1} parent=11 // pred_fallthru
        _
      // Predicated region
      $region17: #{forward.1} parent=11 // pred_check
        %p148 = pneg %p104
      $region18: #{forward.1} parent=11 // pred_check_branch
        %150 = sbr.rel (%p148) target = $region20
      $region19: #{forward.1} parent=11 // pred_region
        _
      $region20: #{forward.1} parent=11 // pred_fallthru
        _
    $region12: #{forward.1} parent=5 // pred_fallthru
      _
    %p151 = scmp.lt.s32.totalorder %s10, 2
    // Predicated region
    $region21: #{forward.1} parent=5 // pred_check
      %p152 = pneg %p151
    $region22: #{forward.1} parent=5 // pred_check_branch
      %154 = sbr.rel (%p152) target = $region24
    $region23: #{forward.1} parent=5 // pred_region
      // Predicated region
      $region25: #{forward.1} parent=23 // pred_check
        %p155 = pneg %p30
      $region26: #{forward.1} parent=23 // pred_check_branch
        %157 = sbr.rel (%p155) target = $region28
      $region27: #{forward.1} parent=23 // pred_region
        %p158 = scmp.lt.s32.totalorder %s10, 1
        %s159 = scalar_select %p158, %s10, 1
        %s160 = smul.addr %s159, 8
        %s161 = scalar_lea.vmem %s0, %s160
      $region28: #{forward.1} parent=23 // pred_fallthru
        _
      // Predicated region
      $region29: #{forward.1} parent=23 // pred_check
        %p162 = pneg %p56
      $region30: #{forward.1} parent=23 // pred_check_branch
        %164 = sbr.rel (%p162) target = $region32
      $region31: #{forward.1} parent=23 // pred_region
        %p165 = scmp.lt.s32.totalorder %s10, 1
        %s166 = scalar_select %p165, %s10, 1
        %s167 = smul.addr %s166, 8
        %s168 = scalar_lea.vmem %s1, %s167
      $region32: #{forward.1} parent=23 // pred_fallthru
        _
    $region24: #{forward.1} parent=5 // pred_fallthru
      _
    %p169 = scmp.le.s32.totalorder 1, %s10
    %p170 = scmp.lt.s32.totalorder %s10, 3
    %p171 = pnand %p169, %p170
    %p172 = pneg %p171
    // Predicated region
    $region33: #{forward.1} parent=5 // pred_check
      _
    $region34: #{forward.1} parent=5 // pred_check_branch
      %174 = sbr.rel (%p171) target = $region36
    $region35: #{forward.1} parent=5 // pred_region
      %s175 = ssub.s32 %s10, 1
      %p176 = scmp.lt.s32.totalorder %s15, 1
      %s177 = scalar_select %p176, %s15, 1
      %s178 = smul.addr %s177, 8
      %s179 = scalar_lea.vmem %s0, %s178
      %p180 = pneg %p36
      %p181 = pneg %p33
      %p182 = scmp.lt.s32.totalorder %s15, 1
      %s183 = scalar_select %p182, %s15, 1
      %s184 = smul.addr %s183, 8
      %s185 = scalar_lea.vmem %s1, %s184
      %p186 = pneg %p62
      %p187 = pneg %p59
      %p188 = pneg %p83
      %p189 = pneg %p80
      %p190 = pneg %p104
      %p191 = pneg %p101
      %p192 = pneg %p130
      %p193 = pneg %p127
      %p194 = scmp.lt.s32.totalorder %s15, 1
      %s195 = scalar_select %p194, %s15, 1
      %s196 = smul.addr %s195, 8
      %s197 = scalar_lea.vmem %s4, %s196
      %p198 = scmp.lt.s32.totalorder %s15, 1
      %s199 = scalar_select %p198, %s15, 1
      %s200 = smul.addr %s199, 8
      %s201 = scalar_lea.vmem %s0, %s200
      %p202 = scmp.lt.s32.totalorder %s15, 1
      %s203 = scalar_select %p202, %s15, 1
      %s204 = smul.addr %s203, 8
      %s205 = scalar_lea.vmem %s1, %s204
      %p206 = scmp.lt.s32.totalorder %s15, 1
      %s207 = scalar_select %p206, %s15, 1
      %s208 = smul.addr %s207, 8
      %s209 = scalar_lea.vmem %s4, %s208
      %v210 = vld [vmem:[%s201] sm:$0xff]
      %v211 = vld [vmem:[%s205] sm:$0xff]
      %v212 = vld [vmem:[%s2] sm:$0xff]
      %v213 = vld [vmem:[%s2 + $0x8] sm:$0xff]
      %v214 = vld [vmem:[%s3] sm:$0x1]
      %v216 = vlaneseq
      %v217 = vshrl.u32 %v216, 7
      %v218 = vsub.s32 0, %v217
      %v219 = vrot.slane %v214, %v218
      %vm221 = vcmask 130048
      %v223 = vsel %vm221, %v210, 0
      %225 = vmatprep.subr.mxu0 0.0
      %226 = vmatpush1.msra.mxu0 %v212
      %227 = vmatprep.subr.mxu0 0.0
      %228 = vmatpush1.msra.mxu0 %v213
      %229 = vmatprep.subr.mxu0 0.0
      %230 = vmatpush1.msra.mxu0 0.0
      %231 = vmatprep.subr.mxu0 0.0
      %232 = vmatpush1.msra.mxu0 0.0
      %233 = vmatprep.subr.mxu0 0.0
      %234 = vmatpush1.msra.mxu0 0.0
      %235 = vmatprep.subr.mxu0 0.0
      %236 = vmatpush1.msra.mxu0 0.0
      %237 = vmatprep.subr.mxu0 0.0
      %238 = vmatpush1.msra.mxu0 0.0
      %239 = vmatprep.subr.mxu0 0.0
      %240 = vmatpush1.msra.mxu0 0.0
      %241 = vmatprep.subr.mxu0 0.0
      %242 = vmatpush1.msra.mxu0 0.0
      %243 = vmatprep.subr.mxu0 0.0
      %244 = vmatpush1.msra.mxu0 0.0
      %245 = vmatprep.subr.mxu0 0.0
      %246 = vmatpush1.msra.mxu0 0.0
      %247 = vmatprep.subr.mxu0 0.0
      %248 = vmatpush1.msra.mxu0 0.0
      %249 = vmatprep.subr.mxu0 0.0
      %250 = vmatpush1.msra.mxu0 0.0
      %251 = vmatprep.subr.mxu0 0.0
      %252 = vmatpush1.msra.mxu0 0.0
      %253 = vmatprep.subr.mxu0 0.0
      %254 = vmatpush1.msra.mxu0 0.0
      %255 = vmatprep.subr.mxu0 0.0
      %256 = vmatpush1.msra.mxu0 0.0
      %257 = vmatprep.subr.mxu0 0.0
      %258 = vmatpush1.msra.mxu0 0.0
      %259 = vmatprep.subr.mxu0 0.0
      %260 = vmatpush1.msra.mxu0 0.0
      %261 = vmatprep.subr.mxu0 0.0
      %262 = vmatpush1.msra.mxu0 0.0
      %263 = vmatprep.subr.mxu0 0.0
      %264 = vmatpush1.msra.mxu0 0.0
      %265 = vmatprep.subr.mxu0 0.0
      %266 = vmatpush1.msra.mxu0 0.0
      %267 = vmatprep.subr.mxu0 0.0
      %268 = vmatpush1.msra.mxu0 0.0
      %269 = vmatprep.subr.mxu0 0.0
      %270 = vmatpush1.msra.mxu0 0.0
      %271 = vmatprep.subr.mxu0 0.0
      %272 = vmatpush1.msra.mxu0 0.0
      %273 = vmatprep.subr.mxu0 0.0
      %274 = vmatpush1.msra.mxu0 0.0
      %275 = vmatprep.subr.mxu0 0.0
      %276 = vmatpush1.msra.mxu0 0.0
      %277 = vmatprep.subr.mxu0 0.0
      %278 = vmatpush1.msra.mxu0 0.0
      %279 = vmatprep.subr.mxu0 0.0
      %280 = vmatpush1.msra.mxu0 0.0
      %281 = vmatprep.subr.mxu0 0.0
      %282 = vmatpush1.msra.mxu0 0.0
      %283 = vmatprep.subr.mxu0 0.0
      %284 = vmatpush1.msra.mxu0 0.0
      %285 = vmatprep.subr.mxu0 0.0
      %286 = vmatpush1.msra.mxu0 0.0
      %287 = vmatprep.subr.mxu0 0.0
      %288 = vmatpush1.msra.mxu0 0.0
      %289 = vmatprep.mubr.f32.mxu0 0.0
      %290 = vmatmul.mubr.f32.gmra.mrb[0].mxu0 %v223
      %v291 = vpop.f32.mrb[0].mxu0
      %v292 = vadd.f32 %v219, %v291
      %v293 = vpop.f32.mrb[0].mxu0
      %294 = vdwg.mxu0
      %v295 = vmax.f32 %v292, 0.0
      %v296 = vld [vmem:[%s2 + $0x10] sm:$0xff]
      %v297 = vld [vmem:[%s2 + $0x18] sm:$0xff]
      %v298 = vld [vmem:[%s2 + $0x20] sm:$0xff]
      %v299 = vld [vmem:[%s2 + $0x28] sm:$0xff]
      %300 = vrot.lane.b32.xlu0 %v219, 96
      %v301 = vpop.permute.xlu0 %300
      %vm303 = vcmask 261120
      %v305 = vsel %vm303, %v295, 0
      %307 = vmatprep.subr.mxu0 0.0
      %308 = vmatpush1.msra.mxu0 %v296
      %309 = vmatprep.subr.mxu0 0.0
      %310 = vmatpush1.msra.mxu0 %v297
      %311 = vmatprep.subr.mxu0 0.0
      %312 = vmatpush1.msra.mxu0 %v298
      %313 = vmatprep.subr.mxu0 0.0
      %314 = vmatpush1.msra.mxu0 %v299
      %315 = vmatprep.subr.mxu0 0.0
      %316 = vmatpush1.msra.mxu0 0.0
      %317 = vmatprep.subr.mxu0 0.0
      %318 = vmatpush1.msra.mxu0 0.0
      %319 = vmatprep.subr.mxu0 0.0
      %320 = vmatpush1.msra.mxu0 0.0
      %321 = vmatprep.subr.mxu0 0.0
      %322 = vmatpush1.msra.mxu0 0.0
      %323 = vmatprep.subr.mxu0 0.0
      %324 = vmatpush1.msra.mxu0 0.0
      %325 = vmatprep.subr.mxu0 0.0
      %326 = vmatpush1.msra.mxu0 0.0
      %327 = vmatprep.subr.mxu0 0.0
      %328 = vmatpush1.msra.mxu0 0.0
      %329 = vmatprep.subr.mxu0 0.0
      %330 = vmatpush1.msra.mxu0 0.0
      %331 = vmatprep.subr.mxu0 0.0
      %332 = vmatpush1.msra.mxu0 0.0
      %333 = vmatprep.subr.mxu0 0.0
      %334 = vmatpush1.msra.mxu0 0.0
      %335 = vmatprep.subr.mxu0 0.0
      %336 = vmatpush1.msra.mxu0 0.0
      %337 = vmatprep.subr.mxu0 0.0
      %338 = vmatpush1.msra.mxu0 0.0
      %339 = vmatprep.subr.mxu0 0.0
      %340 = vmatpush1.msra.mxu0 0.0
      %341 = vmatprep.subr.mxu0 0.0
      %342 = vmatpush1.msra.mxu0 0.0
      %343 = vmatprep.subr.mxu0 0.0
      %344 = vmatpush1.msra.mxu0 0.0
      %345 = vmatprep.subr.mxu0 0.0
      %346 = vmatpush1.msra.mxu0 0.0
      %347 = vmatprep.subr.mxu0 0.0
      %348 = vmatpush1.msra.mxu0 0.0
      %349 = vmatprep.subr.mxu0 0.0
      %350 = vmatpush1.msra.mxu0 0.0
      %351 = vmatprep.subr.mxu0 0.0
      %352 = vmatpush1.msra.mxu0 0.0
      %353 = vmatprep.subr.mxu0 0.0
      %354 = vmatpush1.msra.mxu0 0.0
      %355 = vmatprep.subr.mxu0 0.0
      %356 = vmatpush1.msra.mxu0 0.0
      %357 = vmatprep.subr.mxu0 0.0
      %358 = vmatpush1.msra.mxu0 0.0
      %359 = vmatprep.subr.mxu0 0.0
      %360 = vmatpush1.msra.mxu0 0.0
      %361 = vmatprep.subr.mxu0 0.0
      %362 = vmatpush1.msra.mxu0 0.0
      %363 = vmatprep.subr.mxu0 0.0
      %364 = vmatpush1.msra.mxu0 0.0
      %365 = vmatprep.subr.mxu0 0.0
      %366 = vmatpush1.msra.mxu0 0.0
      %367 = vmatprep.subr.mxu0 0.0
      %368 = vmatpush1.msra.mxu0 0.0
      %369 = vmatprep.subr.mxu0 0.0
      %370 = vmatpush1.msra.mxu0 0.0
      %371 = vmatprep.mubr.f32.mxu0 0.0
      %372 = vmatmul.mubr.f32.gmra.mrb[0].mxu0 %v305
      %v373 = vpop.f32.mrb[0].mxu0
      %v374 = vadd.f32 %v301, %v373
      %v375 = vpop.f32.mrb[0].mxu0
      %376 = vdwg.mxu0
      %v377 = vmax.f32 %v374, 0.0
      %v378 = vld [vmem:[%s2 + $0x30] sm:$0xff]
      %v379 = vld [vmem:[%s2 + $0x38] sm:$0xff]
      %v380 = vld [vmem:[%s2 + $0x40] sm:$0xff]
      %v381 = vld [vmem:[%s2 + $0x48] sm:$0xff]
      %382 = vrot.lane.b32.xlu0 %v219, 64
      %v383 = vpop.permute.xlu0 %382
      %v386 = vsel %vm303, %v377, 0
      %388 = vmatprep.subr.mxu0 0.0
      %389 = vmatpush1.msra.mxu0 %v378
      %390 = vmatprep.subr.mxu0 0.0
      %391 = vmatpush1.msra.mxu0 %v379
      %392 = vmatprep.subr.mxu0 0.0
      %393 = vmatpush1.msra.mxu0 %v380
      %394 = vmatprep.subr.mxu0 0.0
      %395 = vmatpush1.msra.mxu0 %v381
      %396 = vmatprep.subr.mxu0 0.0
      %397 = vmatpush1.msra.mxu0 0.0
      %398 = vmatprep.subr.mxu0 0.0
      %399 = vmatpush1.msra.mxu0 0.0
      %400 = vmatprep.subr.mxu0 0.0
      %401 = vmatpush1.msra.mxu0 0.0
      %402 = vmatprep.subr.mxu0 0.0
      %403 = vmatpush1.msra.mxu0 0.0
      %404 = vmatprep.subr.mxu0 0.0
      %405 = vmatpush1.msra.mxu0 0.0
      %406 = vmatprep.subr.mxu0 0.0
      %407 = vmatpush1.msra.mxu0 0.0
      %408 = vmatprep.subr.mxu0 0.0
      %409 = vmatpush1.msra.mxu0 0.0
      %410 = vmatprep.subr.mxu0 0.0
      %411 = vmatpush1.msra.mxu0 0.0
      %412 = vmatprep.subr.mxu0 0.0
      %413 = vmatpush1.msra.mxu0 0.0
      %414 = vmatprep.subr.mxu0 0.0
      %415 = vmatpush1.msra.mxu0 0.0
      %416 = vmatprep.subr.mxu0 0.0
      %417 = vmatpush1.msra.mxu0 0.0
      %418 = vmatprep.subr.mxu0 0.0
      %419 = vmatpush1.msra.mxu0 0.0
      %420 = vmatprep.subr.mxu0 0.0
      %421 = vmatpush1.msra.mxu0 0.0
      %422 = vmatprep.subr.mxu0 0.0
      %423 = vmatpush1.msra.mxu0 0.0
      %424 = vmatprep.subr.mxu0 0.0
      %425 = vmatpush1.msra.mxu0 0.0
      %426 = vmatprep.subr.mxu0 0.0
      %427 = vmatpush1.msra.mxu0 0.0
      %428 = vmatprep.subr.mxu0 0.0
      %429 = vmatpush1.msra.mxu0 0.0
      %430 = vmatprep.subr.mxu0 0.0
      %431 = vmatpush1.msra.mxu0 0.0
      %432 = vmatprep.subr.mxu0 0.0
      %433 = vmatpush1.msra.mxu0 0.0
      %434 = vmatprep.subr.mxu0 0.0
      %435 = vmatpush1.msra.mxu0 0.0
      %436 = vmatprep.subr.mxu0 0.0
      %437 = vmatpush1.msra.mxu0 0.0
      %438 = vmatprep.subr.mxu0 0.0
      %439 = vmatpush1.msra.mxu0 0.0
      %440 = vmatprep.subr.mxu0 0.0
      %441 = vmatpush1.msra.mxu0 0.0
      %442 = vmatprep.subr.mxu0 0.0
      %443 = vmatpush1.msra.mxu0 0.0
      %444 = vmatprep.subr.mxu0 0.0
      %445 = vmatpush1.msra.mxu0 0.0
      %446 = vmatprep.subr.mxu0 0.0
      %447 = vmatpush1.msra.mxu0 0.0
      %448 = vmatprep.subr.mxu0 0.0
      %449 = vmatpush1.msra.mxu0 0.0
      %450 = vmatprep.subr.mxu0 0.0
      %451 = vmatpush1.msra.mxu0 0.0
      %452 = vmatprep.mubr.f32.mxu0 0.0
      %453 = vmatmul.mubr.f32.gmra.mrb[0].mxu0 %v386
      %v454 = vpop.f32.mrb[0].mxu0
      %v455 = vadd.f32 %v383, %v454
      %v456 = vpop.f32.mrb[0].mxu0
      %457 = vdwg.mxu0
      %v458 = vmax.f32 %v455, 0.0
      %v459 = vld [vmem:[%s2 + $0x50] sm:$0xff]
      %v460 = vld [vmem:[%s2 + $0x58] sm:$0xff]
      %v461 = vld [vmem:[%s2 + $0x60] sm:$0xff]
      %v462 = vld [vmem:[%s2 + $0x68] sm:$0xff]
      %463 = vrot.lane.b32.xlu0 %v219, 32
      %v464 = vpop.permute.xlu0 %463
      %v467 = vsel %vm303, %v458, 0
      %469 = vmatprep.subr.mxu0 0.0
      %470 = vmatpush1.msra.mxu0 %v459
      %471 = vmatprep.subr.mxu0 0.0
      %472 = vmatpush1.msra.mxu0 %v460
      %473 = vmatprep.subr.mxu0 0.0
      %474 = vmatpush1.msra.mxu0 %v461
      %475 = vmatprep.subr.mxu0 0.0
      %476 = vmatpush1.msra.mxu0 %v462
      %477 = vmatprep.subr.mxu0 0.0
      %478 = vmatpush1.msra.mxu0 0.0
      %479 = vmatprep.subr.mxu0 0.0
      %480 = vmatpush1.msra.mxu0 0.0
      %481 = vmatprep.subr.mxu0 0.0
      %482 = vmatpush1.msra.mxu0 0.0
      %483 = vmatprep.subr.mxu0 0.0
      %484 = vmatpush1.msra.mxu0 0.0
      %485 = vmatprep.subr.mxu0 0.0
      %486 = vmatpush1.msra.mxu0 0.0
      %487 = vmatprep.subr.mxu0 0.0
      %488 = vmatpush1.msra.mxu0 0.0
      %489 = vmatprep.subr.mxu0 0.0
      %490 = vmatpush1.msra.mxu0 0.0
      %491 = vmatprep.subr.mxu0 0.0
      %492 = vmatpush1.msra.mxu0 0.0
      %493 = vmatprep.subr.mxu0 0.0
      %494 = vmatpush1.msra.mxu0 0.0
      %495 = vmatprep.subr.mxu0 0.0
      %496 = vmatpush1.msra.mxu0 0.0
      %497 = vmatprep.subr.mxu0 0.0
      %498 = vmatpush1.msra.mxu0 0.0
      %499 = vmatprep.subr.mxu0 0.0
      %500 = vmatpush1.msra.mxu0 0.0
      %501 = vmatprep.subr.mxu0 0.0
      %502 = vmatpush1.msra.mxu0 0.0
      %503 = vmatprep.subr.mxu0 0.0
      %504 = vmatpush1.msra.mxu0 0.0
      %505 = vmatprep.subr.mxu0 0.0
      %506 = vmatpush1.msra.mxu0 0.0
      %507 = vmatprep.subr.mxu0 0.0
      %508 = vmatpush1.msra.mxu0 0.0
      %509 = vmatprep.subr.mxu0 0.0
      %510 = vmatpush1.msra.mxu0 0.0
      %511 = vmatprep.subr.mxu0 0.0
      %512 = vmatpush1.msra.mxu0 0.0
      %513 = vmatprep.subr.mxu0 0.0
      %514 = vmatpush1.msra.mxu0 0.0
      %515 = vmatprep.subr.mxu0 0.0
      %516 = vmatpush1.msra.mxu0 0.0
      %517 = vmatprep.subr.mxu0 0.0
      %518 = vmatpush1.msra.mxu0 0.0
      %519 = vmatprep.subr.mxu0 0.0
      %520 = vmatpush1.msra.mxu0 0.0
      %521 = vmatprep.subr.mxu0 0.0
      %522 = vmatpush1.msra.mxu0 0.0
      %523 = vmatprep.subr.mxu0 0.0
      %524 = vmatpush1.msra.mxu0 0.0
      %525 = vmatprep.subr.mxu0 0.0
      %526 = vmatpush1.msra.mxu0 0.0
      %527 = vmatprep.subr.mxu0 0.0
      %528 = vmatpush1.msra.mxu0 0.0
      %529 = vmatprep.subr.mxu0 0.0
      %530 = vmatpush1.msra.mxu0 0.0
      %531 = vmatprep.subr.mxu0 0.0
      %532 = vmatpush1.msra.mxu0 0.0
      %533 = vmatprep.mubr.f32.mxu0 0.0
      %534 = vmatmul.mubr.f32.gmra.mrb[0].mxu0 %v467
      %v535 = vpop.f32.mrb[0].mxu0
      %v536 = vadd.f32 %v464, %v535
      %v537 = vpop.f32.mrb[0].mxu0
      %538 = vdwg.mxu0
      %v539 = vmax.f32 %v536, -10.0
      %v540 = vmin.f32 %v539, -0.6931472
      %v541 = vmul.f32 %v540, 1.442695
      %v542 = vpow.pop %v541
      %544 = vrot.lane.b32.xlu0 %v542, 124
      %v545 = vpop.permute.xlu0 %544
      %v547 = vmul.f32 %v211, %v545
      %v548 = vadd.f32 %v547, %v536
      %v549 = vmul.f32 %v211, -0.5
      %v550 = vmul.f32 %v549, %v211
      %vm551 = vcmask 31744
      %v552 = vsel %vm551, %v550, 0.0
      %553 = vadd.xlane.f32.xlu0 %v552
      %v554 = vpop.xlane.xlu0 %553
      %v555 = vsub.f32 %v554, 3.675754
      %557 = vrot.lane.b32.xlu0 %v540, 124
      %v558 = vpop.permute.xlu0 %557
      %v560 = vsel %vm551, %v558, 0.0
      %561 = vadd.xlane.f32.xlu0 %v560
      %v562 = vpop.xlane.xlu0 %561
      %v563 = vsub.f32 %v555, %v562
      %v564 = vmax.f32 %v548, -4.951719
      %v565 = vmin.f32 %v564, 4.951719
      %v566 = vtanh.pop %v565
      %v567 = vmul.f32 %v566, 10.0
      %v568 = vsub.f32 0.6931472, %v565
      %v569 = vmul.f32 %v565, -2.0
      %v570 = vmax.f32 %v569, 0.0
      %v571 = vand.u32 2147483647, %v569
      %v572 = vsub.f32 0.0, %v571
      %v573 = vmul.f32 %v572, 1.442695
      %v574 = vpow.pop %v573
      %v575 = vadd.f32 %v574, 1.0
      %v576 = vlog2.pop %v575
      %v577 = vmul.f32 %v576, 0.6931472
      %v578 = vmul.f32 -0.5, %v574
      %v579 = vadd.f32 %v578, 1.0
      %v580 = vmul.f32 %v579, %v574
      %v581 = vand.u32 2147483647, %v574
      %vm582 = vcmp.lt.f32.partialorder %v581, 0.0004427343
      %v583 = vsel %vm582, %v580, %v577
      %v584 = vadd.f32 %v570, %v583
      %v585 = vsub.f32 %v568, %v584
      %v586 = vmul.f32 %v585, 2.0
      %v587 = vsel %vm551, %v586, 0.0
      %588 = vadd.xlane.f32.xlu0 %v587
      %v589 = vpop.xlane.xlu0 %588
      %v590 = vsub.f32 0.0, %v589
      %v591 = vsub.f32 %v590, 9.2103405
      %v592 = vadd.f32 %v563, %v591
      %593 = vst [vmem:[%s209] sm:$0xff] 0.0
      %594 = vst.msk [vmem:[%s209] sm:$0xff] %vm551, %v567
      %vm595 = vcmask 39968
      %596 = vst.msk [vmem:[%s209] sm:$0xff] %vm595, %v592
      %p597 = scmp.lt.s32.totalorder %s15, 1
      %s598 = scalar_select %p597, %s15, 1
      %s599 = smul.addr %s598, 8
      %s600 = scalar_lea.vmem %s4, %s599
      // Predicated region
      $region37: #{forward.1} parent=35 // pred_check
        %p601 = pneg %p127
      $region38: #{forward.1} parent=35 // pred_check_branch
        %603 = sbr.rel (%p601) target = $region40
      $region39: #{forward.1} parent=35 // pred_region
        _
      $region40: #{forward.1} parent=35 // pred_fallthru
        _
    $region36: #{forward.1} parent=5 // pred_fallthru
      _
    %p604 = scmp.le.s32.totalorder 2, %s10
    // Predicated region
    $region41: #{forward.1} parent=5 // pred_check
      %p605 = pneg %p604
    $region42: #{forward.1} parent=5 // pred_check_branch
      %607 = sbr.rel (%p605) target = $region44
    $region43: #{forward.1} parent=5 // pred_region
      %s608 = ssub.s32 %s10, 2
      // Predicated region
      $region45: #{forward.1} parent=43 // pred_check
        %p609 = pneg %p133
      $region46: #{forward.1} parent=43 // pred_check_branch
        %611 = sbr.rel (%p609) target = $region48
      $region47: #{forward.1} parent=43 // pred_region
        %p612 = scmp.lt.s32.totalorder %s16, 1
        %s613 = scalar_select %p612, %s16, 1
        %s614 = smul.addr %s613, 8
        %s615 = scalar_lea.vmem %s4, %s614
      $region48: #{forward.1} parent=43 // pred_fallthru
        _
    $region44: #{forward.1} parent=5 // pred_fallthru
      _
  $region6: #{forward.1} parent=0 // loop_footer
    %s14 = sadd.s32 1, %s10
  $region7: #{forward.1} parent=0 // loop_footer_branch
    %9 = sbr.rel target = $region3
  $region8: #{forward.1} parent=0 // loop_exit
    _

</llo_original>
